<compile_context>
chip_gen: v6e
topology: v6e:2x2x1
jax: 0.10.0
libtpu: 0.0.40
codegen_flags: <defaults>
</compile_context>

<pallas_src>
import functools

import jax
import jax.numpy as jnp
from jax.experimental import pallas as pl
from jax.experimental.pallas import tpu as pltpu

LANES = 128
SUBLANES = 8


def _partial_sums_kernel(tp_ref, fp_ref, fn_ref,
                         tp_acc, fp_acc, fn_acc,
                         *, block_rows, inner_blocks, valid_rows, needs_mask):
    c = pl.program_id(0)
    i = pl.program_id(1)

    @pl.when(i == 0)
    def _():
        tp_acc[...] = jnp.zeros_like(tp_acc)
        fp_acc[...] = jnp.zeros_like(fp_acc)
        fn_acc[...] = jnp.zeros_like(fn_acc)

    if needs_mask:
        # Intended (unclamped) block index; rows past `valid_rows` (ragged
        # last block or a fully-out-of-range duplicated block) are zeroed.
        intended_block = c * inner_blocks + i
        row_ids = jax.lax.broadcasted_iota(jnp.int32, (block_rows, LANES), 0)
        global_rows = intended_block * block_rows + row_ids
        mask = global_rows < valid_rows

    def fold(ref, acc):
        v = ref[...].astype(jnp.float32)
        if needs_mask:
            v = jnp.where(mask, v, 0.0)
        # (block_rows, 128) -> (block_rows//8, 8, 128) -> sum over major axis:
        # pure VPU vreg adds folded into the resident (8, 128) accumulator.
        acc[...] += v.reshape(block_rows // SUBLANES, SUBLANES, LANES).sum(axis=0)

    fold(tp_ref, tp_acc)
    fold(fp_ref, fp_acc)
    fold(fn_ref, fn_acc)


def _pallas_sums(tp2, fp2, fn2, *, block_rows):
    rows = tp2.shape[0]                       # static, multiple of 8
    block_rows = max(SUBLANES, (block_rows // SUBLANES) * SUBLANES)
    block_rows = min(block_rows, rows)
    num_blocks = pl.cdiv(rows, block_rows)
    # 2-way megacore split for v7x; size-1 (no-op) when there is only 1 block.
    num_par = 2 if num_blocks >= 2 else 1
    inner_blocks = pl.cdiv(num_blocks, num_par)
    needs_mask = (num_par * inner_blocks * block_rows) != rows

    def in_map(c, i):
        # Clamp fully-out-of-range (duplicated) block indices; their
        # contribution is zeroed by the in-kernel row mask.
        return (jnp.minimum(c * inner_blocks + i, num_blocks - 1), 0)

    kernel = functools.partial(
        _partial_sums_kernel,
        block_rows=block_rows, inner_blocks=inner_blocks,
        valid_rows=rows, needs_mask=needs_mask)

    in_spec = pl.BlockSpec((block_rows, LANES), in_map)
    out_spec = pl.BlockSpec((None, SUBLANES, LANES), lambda c, i: (c, 0, 0))
    acc_shape = jax.ShapeDtypeStruct((num_par, SUBLANES, LANES), jnp.float32)

    tp_p, fp_p, fn_p = pl.pallas_call(
        kernel,
        out_shape=(acc_shape, acc_shape, acc_shape),
        grid_spec=pltpu.PrefetchScalarGridSpec(
            num_scalar_prefetch=0,
            grid=(num_par, inner_blocks),
            in_specs=[in_spec, in_spec, in_spec],
            out_specs=[out_spec, out_spec, out_spec],
        ),
        compiler_params=pltpu.CompilerParams(
            dimension_semantics=("parallel", "arbitrary")),
    )(tp2, fp2, fn2)

    # Final cross-lane reduce over tiny (num_par, 8, 128) partials: negligible.
    return jnp.sum(tp_p), jnp.sum(fp_p), jnp.sum(fn_p)


@functools.partial(jax.jit, static_argnames=("block_rows",))
def iou_score_micro(tp, fp, fn, tn, *, block_rows=2048):
    """Equivalent of smp.metrics.iou_score(tp, fp, fn, tn, reduction='micro')."""
    assert tp.shape == fp.shape == fn.shape == tn.shape
    del tn  # true negatives do not enter the IoU formula

    n = tp.size
    tile = SUBLANES * LANES                    # 1024 elements = one (8,128) vreg
    main = (n // tile) * tile                  # aligned prefix handled by kernel
    main_rows = main // LANES

    tpf = tp.reshape(-1)
    fpf = fp.reshape(-1)
    fnf = fn.reshape(-1)

    if main_rows > 0:
        tp_s, fp_s, fn_s = _pallas_sums(
            tpf[:main].reshape(main_rows, LANES),
            fpf[:main].reshape(main_rows, LANES),
            fnf[:main].reshape(main_rows, LANES),
            block_rows=block_rows)
    else:
        tp_s = fp_s = fn_s = jnp.float32(0.0)

    if main < n:  # ragged tail (< 1024 elements): plain-JAX sum, negligible
        tp_s = tp_s + jnp.sum(tpf[main:].astype(jnp.float32))
        fp_s = fp_s + jnp.sum(fpf[main:].astype(jnp.float32))
        fn_s = fn_s + jnp.sum(fnf[main:].astype(jnp.float32))

    denom = tp_s + fp_s + fn_s
    safe_denom = jnp.where(denom > 0, denom, jnp.float32(1.0))
    # smp default zero_division=1.0 guard (denom > 0 in normal use).
    return jnp.where(denom > 0, tp_s / safe_denom, jnp.float32(1.0))


def _reference(tp, fp, fn):
    t = jnp.sum(tp.astype(jnp.float32))
    p = jnp.sum(fp.astype(jnp.float32))
    f = jnp.sum(fn.astype(jnp.float32))
    return t / (t + p + f)


if __name__ == "__main__":
    key = jax.random.PRNGKey(0)
    k1, k2, k3, k4, k5, k6, k7, k8 = jax.random.split(key, 8)

    # Primary small test: batch=2, classes=4, 16x16 per-block confusion stats.
    shape = (2, 4, 16, 16)
    tp = jax.random.randint(k1, shape, 0, 100, dtype=jnp.int32)
    fp = jax.random.randint(k2, shape, 0, 100, dtype=jnp.int32)
    fn = jax.random.randint(k3, shape, 0, 100, dtype=jnp.int32)
    tn = jax.random.randint(k4, shape, 0, 100, dtype=jnp.int32)

    out = iou_score_micro(tp, fp, fn, tn)
    jax.block_until_ready(out)
    ref = _reference(tp, fp, fn)
    assert jnp.allclose(out, ref, atol=1e-6, rtol=1e-6), (out, ref)

    # Secondary ragged test (exercises tail + row mask + 2-way parallel axis).
    shape2 = (3, 5, 29, 17)
    tp2 = jax.random.randint(k5, shape2, 0, 50, dtype=jnp.int32)
    fp2 = jax.random.randint(k6, shape2, 0, 50, dtype=jnp.int32)
    fn2 = jax.random.randint(k7, shape2, 0, 50, dtype=jnp.int32)
    tn2 = jax.random.randint(k8, shape2, 0, 50, dtype=jnp.int32)

    out2 = iou_score_micro(tp2, fp2, fn2, tn2, block_rows=8)
    jax.block_until_ready(out2)
    ref2 = _reference(tp2, fp2, fn2)
    assert jnp.allclose(out2, ref2, atol=1e-6, rtol=1e-6), (out2, ref2)

    print("KERNEL_OK")
</pallas_src>

<mosaic_0001>
module attributes {stable_mosaic.version = 11 : i64} {
  func.func @_partial_sums_kernel(%arg0: i32, %arg1: i32, %arg2: memref<16x128xi32, #tpu.memory_space<vmem>>, %arg3: memref<16x128xi32, #tpu.memory_space<vmem>>, %arg4: memref<16x128xi32, #tpu.memory_space<vmem>>, %arg5: memref<1x8x128xf32, #tpu.memory_space<vmem>>, %arg6: memref<1x8x128xf32, #tpu.memory_space<vmem>>, %arg7: memref<1x8x128xf32, #tpu.memory_space<vmem>>) attributes {dimension_semantics = [#tpu.dimension_semantics<parallel>, #tpu.dimension_semantics<arbitrary>], iteration_bounds = array<i64: 1, 1>, scalar_prefetch = 0 : i64, scratch_operands = 0 : i64, tpu.core_type = #tpu.core_type<tc>, window_params = [{transform_indices = @transform_0, window_bounds = array<i64: 16, 128>}, {transform_indices = @transform_1, window_bounds = array<i64: 16, 128>}, {transform_indices = @transform_2, window_bounds = array<i64: 16, 128>}, {transform_indices = @transform_3, window_bounds = array<i64: 1, 8, 128>}, {transform_indices = @transform_4, window_bounds = array<i64: 1, 8, 128>}, {transform_indices = @transform_5, window_bounds = array<i64: 1, 8, 128>}]} {
    %c0_i32 = arith.constant 0 : i32
    %0 = arith.cmpi eq, %arg1, %c0_i32 : i32
    %1 = arith.extui %0 : i1 to i32
    %c0_i32_0 = arith.constant 0 : i32
    %2 = arith.cmpi ne, %1, %c0_i32_0 : i32
    scf.if %2 {
      %cst_26 = arith.constant 0.000000e+00 : f32
      %33 = vector.broadcast %cst_26 : f32 to vector<8x128xf32>
      %c0_27 = arith.constant 0 : index
      %c0_28 = arith.constant 0 : index
      %c0_29 = arith.constant 0 : index
      %34 = vector.load %arg5[%c0_27, %c0_28, %c0_29] : memref<1x8x128xf32, #tpu.memory_space<vmem>>, vector<1x8x128xf32>
      %35 = vector.shape_cast %34 : vector<1x8x128xf32> to vector<8x128xf32>
      %36 = vector.shape_cast %33 : vector<8x128xf32> to vector<1x8x128xf32>
      tpu.vector_store %arg5[%c0_27, %c0_28, %c0_29], %36 {strides = array<i32>} : memref<1x8x128xf32, #tpu.memory_space<vmem>>, vector<1x8x128xf32>,
      %cst_30 = arith.constant 0.000000e+00 : f32
      %37 = vector.broadcast %cst_30 : f32 to vector<8x128xf32>
      %c0_31 = arith.constant 0 : index
      %c0_32 = arith.constant 0 : index
      %c0_33 = arith.constant 0 : index
      %38 = vector.load %arg6[%c0_31, %c0_32, %c0_33] : memref<1x8x128xf32, #tpu.memory_space<vmem>>, vector<1x8x128xf32>
      %39 = vector.shape_cast %38 : vector<1x8x128xf32> to vector<8x128xf32>
      %40 = vector.shape_cast %37 : vector<8x128xf32> to vector<1x8x128xf32>
      tpu.vector_store %arg6[%c0_31, %c0_32, %c0_33], %40 {strides = array<i32>} : memref<1x8x128xf32, #tpu.memory_space<vmem>>, vector<1x8x128xf32>,
      %cst_34 = arith.constant 0.000000e+00 : f32
      %41 = vector.broadcast %cst_34 : f32 to vector<8x128xf32>
      %c0_35 = arith.constant 0 : index
      %c0_36 = arith.constant 0 : index
      %c0_37 = arith.constant 0 : index
      %42 = vector.load %arg7[%c0_35, %c0_36, %c0_37] : memref<1x8x128xf32, #tpu.memory_space<vmem>>, vector<1x8x128xf32>
      %43 = vector.shape_cast %42 : vector<1x8x128xf32> to vector<8x128xf32>
      %44 = vector.shape_cast %41 : vector<8x128xf32> to vector<1x8x128xf32>
      tpu.vector_store %arg7[%c0_35, %c0_36, %c0_37], %44 {strides = array<i32>} : memref<1x8x128xf32, #tpu.memory_space<vmem>>, vector<1x8x128xf32>,
    } else {
    }
    %c0 = arith.constant 0 : index
    %c0_1 = arith.constant 0 : index
    %3 = vector.load %arg2[%c0, %c0_1] : memref<16x128xi32, #tpu.memory_space<vmem>>, vector<16x128xi32>
    %4 = arith.sitofp %3 : vector<16x128xi32> to vector<16x128xf32>
    %c0_2 = arith.constant 0 : index
    %c0_3 = arith.constant 0 : index
    %c0_4 = arith.constant 0 : index
    %5 = vector.load %arg5[%c0_2, %c0_3, %c0_4] : memref<1x8x128xf32, #tpu.memory_space<vmem>>, vector<1x8x128xf32>
    %6 = vector.shape_cast %5 : vector<1x8x128xf32> to vector<8x128xf32>
    %7 = vector.shape_cast %4 : vector<16x128xf32> to vector<2x8x128xf32>
    %cst = arith.constant dense<0.000000e+00> : vector<8x128xf32>
    %8 = vector.multi_reduction <add>, %7, %cst [0] : vector<2x8x128xf32> to vector<8x128xf32>
    %9 = arith.addf %6, %8 : vector<8x128xf32>
    %c0_5 = arith.constant 0 : index
    %c0_6 = arith.constant 0 : index
    %c0_7 = arith.constant 0 : index
    %10 = vector.load %arg5[%c0_5, %c0_6, %c0_7] : memref<1x8x128xf32, #tpu.memory_space<vmem>>, vector<1x8x128xf32>
    %11 = vector.shape_cast %10 : vector<1x8x128xf32> to vector<8x128xf32>
    %12 = vector.shape_cast %9 : vector<8x128xf32> to vector<1x8x128xf32>
    tpu.vector_store %arg5[%c0_5, %c0_6, %c0_7], %12 {strides = array<i32>} : memref<1x8x128xf32, #tpu.memory_space<vmem>>, vector<1x8x128xf32>,
    %c0_8 = arith.constant 0 : index
    %c0_9 = arith.constant 0 : index
    %13 = vector.load %arg3[%c0_8, %c0_9] : memref<16x128xi32, #tpu.memory_space<vmem>>, vector<16x128xi32>
    %14 = arith.sitofp %13 : vector<16x128xi32> to vector<16x128xf32>
    %c0_10 = arith.constant 0 : index
    %c0_11 = arith.constant 0 : index
    %c0_12 = arith.constant 0 : index
    %15 = vector.load %arg6[%c0_10, %c0_11, %c0_12] : memref<1x8x128xf32, #tpu.memory_space<vmem>>, vector<1x8x128xf32>
    %16 = vector.shape_cast %15 : vector<1x8x128xf32> to vector<8x128xf32>
    %17 = vector.shape_cast %14 : vector<16x128xf32> to vector<2x8x128xf32>
    %cst_13 = arith.constant dense<0.000000e+00> : vector<8x128xf32>
    %18 = vector.multi_reduction <add>, %17, %cst_13 [0] : vector<2x8x128xf32> to vector<8x128xf32>
    %19 = arith.addf %16, %18 : vector<8x128xf32>
    %c0_14 = arith.constant 0 : index
    %c0_15 = arith.constant 0 : index
    %c0_16 = arith.constant 0 : index
    %20 = vector.load %arg6[%c0_14, %c0_15, %c0_16] : memref<1x8x128xf32, #tpu.memory_space<vmem>>, vector<1x8x128xf32>
    %21 = vector.shape_cast %20 : vector<1x8x128xf32> to vector<8x128xf32>
    %22 = vector.shape_cast %19 : vector<8x128xf32> to vector<1x8x128xf32>
    tpu.vector_store %arg6[%c0_14, %c0_15, %c0_16], %22 {strides = array<i32>} : memref<1x8x128xf32, #tpu.memory_space<vmem>>, vector<1x8x128xf32>,
    %c0_17 = arith.constant 0 : index
    %c0_18 = arith.constant 0 : index
    %23 = vector.load %arg4[%c0_17, %c0_18] : memref<16x128xi32, #tpu.memory_space<vmem>>, vector<16x128xi32>
    %24 = arith.sitofp %23 : vector<16x128xi32> to vector<16x128xf32>
    %c0_19 = arith.constant 0 : index
    %c0_20 = arith.constant 0 : index
    %c0_21 = arith.constant 0 : index
    %25 = vector.load %arg7[%c0_19, %c0_20, %c0_21] : memref<1x8x128xf32, #tpu.memory_space<vmem>>, vector<1x8x128xf32>
    %26 = vector.shape_cast %25 : vector<1x8x128xf32> to vector<8x128xf32>
    %27 = vector.shape_cast %24 : vector<16x128xf32> to vector<2x8x128xf32>
    %cst_22 = arith.constant dense<0.000000e+00> : vector<8x128xf32>
    %28 = vector.multi_reduction <add>, %27, %cst_22 [0] : vector<2x8x128xf32> to vector<8x128xf32>
    %29 = arith.addf %26, %28 : vector<8x128xf32>
    %c0_23 = arith.constant 0 : index
    %c0_24 = arith.constant 0 : index
    %c0_25 = arith.constant 0 : index
    %30 = vector.load %arg7[%c0_23, %c0_24, %c0_25] : memref<1x8x128xf32, #tpu.memory_space<vmem>>, vector<1x8x128xf32>
    %31 = vector.shape_cast %30 : vector<1x8x128xf32> to vector<8x128xf32>
    %32 = vector.shape_cast %29 : vector<8x128xf32> to vector<1x8x128xf32>
    tpu.vector_store %arg7[%c0_23, %c0_24, %c0_25], %32 {strides = array<i32>} : memref<1x8x128xf32, #tpu.memory_space<vmem>>, vector<1x8x128xf32>,
    return
  }
  func.func @transform_0(%arg0: i32, %arg1: i32) -> (i32, i32) {
    %c1_i32 = arith.constant 1 : i32
    %0 = arith.muli %arg0, %c1_i32 : i32
    %1 = arith.addi %0, %arg1 : i32
    %c0_i32 = arith.constant 0 : i32
    %2 = arith.minsi %1, %c0_i32 : i32
    %c0_i32_0 = arith.constant 0 : i32
    %c0_i32_1 = arith.constant 0 : i32
    return %2, %c0_i32_0 : i32, i32
  }
  func.func @transform_1(%arg0: i32, %arg1: i32) -> (i32, i32) {
    %c1_i32 = arith.constant 1 : i32
    %0 = arith.muli %arg0, %c1_i32 : i32
    %1 = arith.addi %0, %arg1 : i32
    %c0_i32 = arith.constant 0 : i32
    %2 = arith.minsi %1, %c0_i32 : i32
    %c0_i32_0 = arith.constant 0 : i32
    %c0_i32_1 = arith.constant 0 : i32
    return %2, %c0_i32_0 : i32, i32
  }
  func.func @transform_2(%arg0: i32, %arg1: i32) -> (i32, i32) {
    %c1_i32 = arith.constant 1 : i32
    %0 = arith.muli %arg0, %c1_i32 : i32
    %1 = arith.addi %0, %arg1 : i32
    %c0_i32 = arith.constant 0 : i32
    %2 = arith.minsi %1, %c0_i32 : i32
    %c0_i32_0 = arith.constant 0 : i32
    %c0_i32_1 = arith.constant 0 : i32
    return %2, %c0_i32_0 : i32, i32
  }
  func.func @transform_3(%arg0: i32, %arg1: i32) -> (i32, i32, i32) {
    %c0_i32 = arith.constant 0 : i32
    %c0_i32_0 = arith.constant 0 : i32
    %c0_i32_1 = arith.constant 0 : i32
    return %arg0, %c0_i32, %c0_i32_0 : i32, i32, i32
  }
  func.func @transform_4(%arg0: i32, %arg1: i32) -> (i32, i32, i32) {
    %c0_i32 = arith.constant 0 : i32
    %c0_i32_0 = arith.constant 0 : i32
    %c0_i32_1 = arith.constant 0 : i32
    return %arg0, %c0_i32, %c0_i32_0 : i32, i32, i32
  }
  func.func @transform_5(%arg0: i32, %arg1: i32) -> (i32, i32, i32) {
    %c0_i32 = arith.constant 0 : i32
    %c0_i32_0 = arith.constant 0 : i32
    %c0_i32_1 = arith.constant 0 : i32
    return %arg0, %c0_i32, %c0_i32_0 : i32, i32, i32
  }
}

</mosaic_0001>

<llo_original>
// kernel: iou_score_micro.1
$region0: #{iou_score_micro.1}
  #allocation0 [shape = 'u32[]', space=smem, size = 0x4, offset = 0x4, fixed_abs, tag = 'smem constant byte address 0x4 - core index']
  #allocation1 [shape = 'u32[144,128]{1,0:T(1,128)}', space=vmem, size = 0x12000, scoped, tag = 'internal scratch']
  %s0 = inlined_call_operand.vmem [shape: s32[16,128], index: 0, kind: input, shape index: {}]
  %s1 = inlined_call_operand.vmem [shape: s32[16,128], index: 1, kind: input, shape index: {}]
  %s2 = inlined_call_operand.vmem [shape: s32[16,128], index: 2, kind: input, shape index: {}]
  %s3 = inlined_call_operand.vmem [shape: f32[1,8,128], index: 3, kind: output, shape index: {0}]
  %s4 = inlined_call_operand.vmem [shape: f32[1,8,128], index: 4, kind: output, shape index: {1}]
  %s5 = inlined_call_operand.vmem [shape: f32[1,8,128], index: 5, kind: output, shape index: {2}]
  %6 = xla_tuple %s3, %s4, %s5
  %s7 = sld [smem:[#allocation0]]
  $region42: #{iou_score_micro.1} parent=0
    _
  %s9 = ssub.s32 1, %s7
  %s10 = scalar_select 0, %s9, %s7
  // Predicated region
  $region2: #{iou_score_micro.1} parent=0 // pred_check
    _
  $region3: #{iou_score_micro.1} parent=0 // pred_check_branch
    %12 = sbr.rel (0) target = $region5
  $region4: #{iou_score_micro.1} parent=0 // pred_region
    %s13 = sadd.s32 0, 0
    %p14 = scmp.lt.s32.totalorder %s13, 0
    %s15 = scalar_select %p14, %s13, 0
    %s16 = smul.u32 2, %s15
    %p17 = scmp.lt.s32.totalorder %s16, 1
    %s18 = scalar_select %p17, %s16, 1
    %s19 = smul.addr %s18, 8
    %s20 = scalar_lea.vmem %s0, %s19
    %s21 = sadd.s32 0, 0
    %p22 = scmp.lt.s32.totalorder %s21, 0
    %s23 = scalar_select %p22, %s21, 0
    %s24 = smul.u32 2, %s23
  $region5: #{iou_score_micro.1} parent=0 // pred_fallthru
    _
  // Predicated region
  $region6: #{iou_score_micro.1} parent=0 // pred_check
    _
  $region7: #{iou_score_micro.1} parent=0 // pred_check_branch
    %26 = sbr.rel (0) target = $region9
  $region8: #{iou_score_micro.1} parent=0 // pred_region
    %s27 = sadd.s32 0, 0
    %p28 = scmp.lt.s32.totalorder %s27, 0
    %s29 = scalar_select %p28, %s27, 0
    %s30 = smul.u32 2, %s29
    %p31 = scmp.lt.s32.totalorder %s30, 1
    %s32 = scalar_select %p31, %s30, 1
    %s33 = smul.addr %s32, 8
    %s34 = scalar_lea.vmem %s1, %s33
    %s35 = sadd.s32 0, 0
    %p36 = scmp.lt.s32.totalorder %s35, 0
    %s37 = scalar_select %p36, %s35, 0
    %s38 = smul.u32 2, %s37
  $region9: #{iou_score_micro.1} parent=0 // pred_fallthru
    _
  // Predicated region
  $region10: #{iou_score_micro.1} parent=0 // pred_check
    _
  $region11: #{iou_score_micro.1} parent=0 // pred_check_branch
    %40 = sbr.rel (0) target = $region13
  $region12: #{iou_score_micro.1} parent=0 // pred_region
    %s41 = sadd.s32 0, 0
    %p42 = scmp.lt.s32.totalorder %s41, 0
    %s43 = scalar_select %p42, %s41, 0
    %s44 = smul.u32 2, %s43
    %p45 = scmp.lt.s32.totalorder %s44, 1
    %s46 = scalar_select %p45, %s44, 1
    %s47 = smul.addr %s46, 8
    %s48 = scalar_lea.vmem %s2, %s47
    %s49 = sadd.s32 0, 0
    %p50 = scmp.lt.s32.totalorder %s49, 0
    %s51 = scalar_select %p50, %s49, 0
    %s52 = smul.u32 2, %s51
  $region13: #{iou_score_micro.1} parent=0 // pred_fallthru
    _
  %s53 = sadd.s32 0, 0
  %p54 = scmp.lt.s32.totalorder %s53, 0
  %s55 = scalar_select %p54, %s53, 0
  %s56 = smul.u32 2, %s55
  %p57 = scmp.lt.s32.totalorder %s56, 1
  %s58 = scalar_select %p57, %s56, 1
  %s59 = smul.addr %s58, 8
  %s60 = scalar_lea.vmem %s0, %s59
  %s61 = sadd.s32 0, 0
  %p62 = scmp.lt.s32.totalorder %s61, 0
  %s63 = scalar_select %p62, %s61, 0
  %s64 = smul.u32 2, %s63
  %p65 = scmp.lt.s32.totalorder %s64, 1
  %s66 = scalar_select %p65, %s64, 1
  %s67 = smul.addr %s66, 8
  %s68 = scalar_lea.vmem %s1, %s67
  %s69 = sadd.s32 0, 0
  %p70 = scmp.lt.s32.totalorder %s69, 0
  %s71 = scalar_select %p70, %s69, 0
  %s72 = smul.u32 2, %s71
  %p73 = scmp.lt.s32.totalorder %s72, 1
  %s74 = scalar_select %p73, %s72, 1
  %s75 = smul.addr %s74, 8
  %s76 = scalar_lea.vmem %s2, %s75
  %s77 = sadd.s32 0, 0
  %p78 = scmp.lt.s32.totalorder %s77, 0
  %s79 = scalar_select %p78, %s77, 0
  %s80 = smul.u32 2, %s79
  %p81 = scmp.lt.s32.totalorder %s80, 1
  %s82 = scalar_select %p81, %s80, 1
  %s83 = smul.addr %s82, 8
  %s84 = scalar_lea.vmem %s0, %s83
  %s85 = sadd.s32 0, 0
  %p86 = scmp.lt.s32.totalorder %s85, 0
  %s87 = scalar_select %p86, %s85, 0
  %s88 = smul.u32 2, %s87
  %s89 = sadd.s32 0, 0
  %p90 = scmp.lt.s32.totalorder %s89, 0
  %s91 = scalar_select %p90, %s89, 0
  %s92 = smul.u32 2, %s91
  %p93 = scmp.lt.s32.totalorder %s92, 1
  %s94 = scalar_select %p93, %s92, 1
  %s95 = smul.addr %s94, 8
  %s96 = scalar_lea.vmem %s1, %s95
  %s97 = sadd.s32 0, 0
  %p98 = scmp.lt.s32.totalorder %s97, 0
  %s99 = scalar_select %p98, %s97, 0
  %s100 = smul.u32 2, %s99
  %s101 = sadd.s32 0, 0
  %p102 = scmp.lt.s32.totalorder %s101, 0
  %s103 = scalar_select %p102, %s101, 0
  %s104 = smul.u32 2, %s103
  %p105 = scmp.lt.s32.totalorder %s104, 1
  %s106 = scalar_select %p105, %s104, 1
  %s107 = smul.addr %s106, 8
  %s108 = scalar_lea.vmem %s2, %s107
  %s109 = sadd.s32 0, 0
  %p110 = scmp.lt.s32.totalorder %s109, 0
  %s111 = scalar_select %p110, %s109, 0
  %s112 = smul.u32 2, %s111
  %p113 = scmp.eq.s32.totalorder 0, 0
  // Predicated region
  $region14: #{iou_score_micro.1} parent=0 // pred_check
    %p114 = pneg %p113
  $region15: #{iou_score_micro.1} parent=0 // pred_check_branch
    %116 = sbr.rel (%p114) target = $region17
  $region16: #{iou_score_micro.1} parent=0 // pred_region
    %117 = vst [vmem:[%s3] sm:$0xff] 0.0
    %118 = vst [vmem:[%s4] sm:$0xff] 0.0
    %119 = vst [vmem:[%s5] sm:$0xff] 0.0
  $region17: #{iou_score_micro.1} parent=0 // pred_fallthru
    _
  %v120 = vld [vmem:[%s84] sm:$0xff]
  %v121 = vld [vmem:[%s84 + $0x8] sm:$0xff]
  %v122 = vcvt.s32.f32 %v120
  %v123 = vcvt.s32.f32 %v121
  %v124 = vld [vmem:[%s3] sm:$0xff]
  %v125 = vadd.f32 %v122, %v123
  %v126 = vadd.f32 %v124, %v125
  %127 = vst [vmem:[%s3] sm:$0xff] %v126
  %v128 = vld [vmem:[%s96] sm:$0xff]
  %v129 = vld [vmem:[%s96 + $0x8] sm:$0xff]
  %v130 = vcvt.s32.f32 %v128
  %v131 = vcvt.s32.f32 %v129
  %v132 = vld [vmem:[%s4] sm:$0xff]
  %v133 = vadd.f32 %v130, %v131
  %v134 = vadd.f32 %v132, %v133
  %135 = vst [vmem:[%s4] sm:$0xff] %v134
  %v136 = vld [vmem:[%s108] sm:$0xff]
  %v137 = vld [vmem:[%s108 + $0x8] sm:$0xff]
  %v138 = vcvt.s32.f32 %v136
  %v139 = vcvt.s32.f32 %v137
  %v140 = vld [vmem:[%s5] sm:$0xff]
  %v141 = vadd.f32 %v138, %v139
  %v142 = vadd.f32 %v140, %v141
  %143 = vst [vmem:[%s5] sm:$0xff] %v142
  // Predicated region
  $region18: #{iou_score_micro.1} parent=0 // pred_check
    _
  $region19: #{iou_score_micro.1} parent=0 // pred_check_branch
    %145 = sbr.rel (0) target = $region21
  $region20: #{iou_score_micro.1} parent=0 // pred_region
    _
  $region21: #{iou_score_micro.1} parent=0 // pred_fallthru
    _
  // Predicated region
  $region22: #{iou_score_micro.1} parent=0 // pred_check
    _
  $region23: #{iou_score_micro.1} parent=0 // pred_check_branch
    %147 = sbr.rel (0) target = $region25
  $region24: #{iou_score_micro.1} parent=0 // pred_region
    _
  $region25: #{iou_score_micro.1} parent=0 // pred_fallthru
    _
  // Predicated region
  $region26: #{iou_score_micro.1} parent=0 // pred_check
    _
  $region27: #{iou_score_micro.1} parent=0 // pred_check_branch
    %149 = sbr.rel (0) target = $region29
  $region28: #{iou_score_micro.1} parent=0 // pred_region
    _
  $region29: #{iou_score_micro.1} parent=0 // pred_fallthru
    _
  // Predicated region
  $region30: #{iou_score_micro.1} parent=0 // pred_check
    _
  $region31: #{iou_score_micro.1} parent=0 // pred_check_branch
    %151 = sbr.rel (0) target = $region33
  $region32: #{iou_score_micro.1} parent=0 // pred_region
    _
  $region33: #{iou_score_micro.1} parent=0 // pred_fallthru
    _
  // Predicated region
  $region34: #{iou_score_micro.1} parent=0 // pred_check
    _
  $region35: #{iou_score_micro.1} parent=0 // pred_check_branch
    %153 = sbr.rel (0) target = $region37
  $region36: #{iou_score_micro.1} parent=0 // pred_region
    _
  $region37: #{iou_score_micro.1} parent=0 // pred_fallthru
    _
  // Predicated region
  $region38: #{iou_score_micro.1} parent=0 // pred_check
    _
  $region39: #{iou_score_micro.1} parent=0 // pred_check_branch
    %155 = sbr.rel (0) target = $region41
  $region40: #{iou_score_micro.1} parent=0 // pred_region
    _
  $region41: #{iou_score_micro.1} parent=0 // pred_fallthru
    _

</llo_original>
